<compile_context>
chip_gen: v7x
topology: tpu7x:2x2x1
jax: 0.10.0
libtpu: 0.0.40
codegen_flags: <defaults>
</compile_context>

<pallas_src>
import functools

import jax
import jax.numpy as jnp
from jax.experimental import pallas as pl
from jax.experimental.pallas import tpu as pltpu

HIDDEN = 16  # hidden width of the PyTorch module


def _round_up(n, m):
    return ((n + m - 1) // m) * m


def _policy_kernel(x_ref, w_ref, b_ref, o_ref, *, d_out):
    """One batch tile of the forward pass, feature-major / batch-on-lanes.

    x_ref: (16, TB)   input, rows >= d_in are zero
    w_ref: (4, 16, 16) packed transposed weights W_i^T (zero padded)
    b_ref: (16, 4)    packed biases, column i = bias of layer i (zero padded)
    o_ref: (d_out, TB) softmax probabilities
    """
    x = x_ref[...]                                   # (16, TB) f32
    b = b_ref[...]                                   # (16, 4)  f32

    h = jnp.dot(w_ref[0], x, preferred_element_type=jnp.float32) + b[:, 0:1]
    h = jnp.maximum(h, 0.0)

    h = jnp.dot(w_ref[1], h, preferred_element_type=jnp.float32) + b[:, 1:2]
    h = jnp.maximum(h, 0.0)

    h = jnp.dot(w_ref[2], h, preferred_element_type=jnp.float32) + b[:, 2:3]
    h = jnp.maximum(h, 0.0)

    logits = jnp.dot(w_ref[3], h, preferred_element_type=jnp.float32) + b[:, 3:4]

    # Softmax over the feature axis (sublanes); only the first d_out rows are valid.
    lv = logits[:d_out, :]                           # (d_out, TB), static slice
    m = jnp.max(lv, axis=0, keepdims=True)           # (1, TB) sublane reduce
    e = jnp.exp(lv - m)
    s = jnp.sum(e, axis=0, keepdims=True)            # (1, TB)
    o_ref[...] = (e * pl.reciprocal(s, approx=True)).astype(o_ref.dtype)


def policy_forward(x, params, *, block_b=512):
    """x: (B, d_in) f32.  params: dict of (in,out) weights and (1,out) biases.

    Returns (B, d_out) softmax probabilities, identical semantics to the
    PyTorch `Policy.forward`.
    """
    B, d_in = x.shape
    d_out = params["w4"].shape[1]
    H = HIDDEN
    # TODO(synk): d_in/d_out > 16 would need a separate (non-16x16) first/last slab.
    assert d_in <= H and d_out <= H, "packed-slab layout assumes d_in, d_out <= 16"

    # Batch tile on the lane axis: multiple of 128, capped by block_b.
    TB = min(_round_up(block_b, 128), _round_up(max(B, 1), 128))
    B_pad = _round_up(B, TB)

    # x -> (H, B_pad): transposed, feature-padded and batch-padded with zeros.
    xT = jnp.zeros((H, B_pad), jnp.float32).at[:d_in, :B].set(x.T)

    # Weight slab (4, H, H): layer i stored transposed (out, in), zero padded.
    w_slab = jnp.zeros((4, H, H), jnp.float32)
    w_slab = w_slab.at[0, :, :d_in].set(params["w1"].T)    # (16, d_in)
    w_slab = w_slab.at[1].set(params["w2"].T)              # (16, 16)
    w_slab = w_slab.at[2].set(params["w3"].T)              # (16, 16)
    w_slab = w_slab.at[3, :d_out, :].set(params["w4"].T)   # (d_out, 16)

    # Bias slab (H, 4): column i = bias of layer i, zero padded.
    b_slab = jnp.zeros((H, 4), jnp.float32)
    b_slab = b_slab.at[:, 0].set(params["b1"].reshape(-1))
    b_slab = b_slab.at[:, 1].set(params["b2"].reshape(-1))
    b_slab = b_slab.at[:, 2].set(params["b3"].reshape(-1))
    b_slab = b_slab.at[:d_out, 3].set(params["b4"].reshape(-1))

    grid = (B_pad // TB,)
    kernel = functools.partial(_policy_kernel, d_out=d_out)

    outT = pl.pallas_call(
        kernel,
        out_shape=jax.ShapeDtypeStruct((d_out, B_pad), jnp.float32),
        grid_spec=pltpu.PrefetchScalarGridSpec(
            num_scalar_prefetch=0,
            grid=grid,
            in_specs=[
                pl.BlockSpec((H, TB), lambda i: (0, i)),        # x tile (lane-dense)
                pl.BlockSpec((4, H, H), lambda i: (0, 0, 0)),   # weights, VMEM-resident
                pl.BlockSpec((H, 4), lambda i: (0, 0)),         # biases, VMEM-resident
            ],
            out_specs=pl.BlockSpec((d_out, TB), lambda i: (0, i)),
        ),
        compiler_params=pltpu.CompilerParams(
            dimension_semantics=("parallel",),  # megacore sharding on v7x
        ),
    )(xT, w_slab, b_slab)

    return outT[:, :B].T  # back to (B, d_out)


def policy_reference(x, params):
    """Pure-JAX reference identical to the PyTorch module's forward."""
    h = jnp.maximum(x @ params["w1"] + params["b1"], 0.0)
    h = jnp.maximum(h @ params["w2"] + params["b2"], 0.0)
    h = jnp.maximum(h @ params["w3"] + params["b3"], 0.0)
    logits = h @ params["w4"] + params["b4"]
    return jax.nn.softmax(logits, axis=1)


def init_params(key, d_in, d_out, hidden=HIDDEN):
    """Deterministic synthetic parameters (PyTorch Linear init, stored as (in,out))."""
    dims = [(d_in, hidden), (hidden, hidden), (hidden, hidden), (hidden, d_out)]
    params = {}
    for i, (fan_in, fan_out) in enumerate(dims, start=1):
        key, kw, kb = jax.random.split(key, 3)
        bound = 1.0 / jnp.sqrt(fan_in)
        params[f"w{i}"] = jax.random.uniform(
            kw, (fan_in, fan_out), jnp.float32, -bound, bound)
        params[f"b{i}"] = jax.random.uniform(
            kb, (1, fan_out), jnp.float32, -bound, bound)
    return params


if __name__ == "__main__":
    key = jax.random.PRNGKey(0)
    k_x, k_p = jax.random.split(key)

    B, d_in, d_out = 8, 4, 2          # CartPole-like observation/action dims
    x = jax.random.normal(k_x, (B, d_in), jnp.float32)
    params = init_params(k_p, d_in, d_out)

    probs = policy_forward(x, params)
    probs = jax.block_until_ready(probs)

    # sanity: shape, rows sum to ~1 (approx reciprocal -> loosened tolerance),
    # and match against the pure-JAX reference.
    assert probs.shape == (B, d_out)
    assert jnp.allclose(jnp.sum(probs, axis=1), 1.0, atol=2e-3)
    ref = policy_reference(x, params)
    assert jnp.allclose(probs, ref, atol=2e-3, rtol=2e-3)

    print("KERNEL_OK")
</pallas_src>

<mosaic_0001>
module attributes {stable_mosaic.version = 11 : i64} {
  func.func @_policy_kernel(%arg0: i32, %arg1: memref<16x128xf32, #tpu.memory_space<vmem>>, %arg2: memref<4x16x16xf32, #tpu.memory_space<vmem>>, %arg3: memref<16x4xf32, #tpu.memory_space<vmem>>, %arg4: memref<2x128xf32, #tpu.memory_space<vmem>>) attributes {dimension_semantics = [#tpu.dimension_semantics<parallel>], iteration_bounds = array<i64: 1>, scalar_prefetch = 0 : i64, scratch_operands = 0 : i64, tpu.core_type = #tpu.core_type<tc>, window_params = [{transform_indices = @transform_0, window_bounds = array<i64: 16, 128>}, {pipeline_mode = #tpu.pipeline_mode<synchronous>, transform_indices = @transform_1, window_bounds = array<i64: 4, 16, 16>}, {pipeline_mode = #tpu.pipeline_mode<synchronous>, transform_indices = @transform_2, window_bounds = array<i64: 16, 4>}, {transform_indices = @transform_3, window_bounds = array<i64: 2, 128>}]} {
    %c0 = arith.constant 0 : index
    %c0_0 = arith.constant 0 : index
    %0 = vector.load %arg1[%c0, %c0_0] : memref<16x128xf32, #tpu.memory_space<vmem>>, vector<16x128xf32>
    %c0_1 = arith.constant 0 : index
    %c0_2 = arith.constant 0 : index
    %1 = vector.load %arg3[%c0_1, %c0_2] : memref<16x4xf32, #tpu.memory_space<vmem>>, vector<16x4xf32>
    %c0_3 = arith.constant 0 : index
    %c0_4 = arith.constant 0 : index
    %c0_5 = arith.constant 0 : index
    %2 = vector.load %arg2[%c0_3, %c0_4, %c0_5] : memref<4x16x16xf32, #tpu.memory_space<vmem>>, vector<1x16x16xf32>
    %3 = vector.shape_cast %2 : vector<1x16x16xf32> to vector<16x16xf32>
    %cst = arith.constant dense<0.000000e+00> : vector<16x128xf32>
    %4 = tpu.matmul %3, %0, %cst {dimension_numbers = #tpu.dot_dimension_numbers<[1], [0], [0], [1], [0, 0, 1, 1], [], []>} : vector<16x16xf32>, vector<16x128xf32>, vector<16x128xf32> -> vector<16x128xf32>
    %5 = vector.extract_strided_slice %1 {offsets = [0, 0], sizes = [16, 1], strides = [1, 1]} : vector<16x4xf32> to vector<16x1xf32>
    %6 = vector.broadcast %5 : vector<16x1xf32> to vector<16x128xf32>
    %7 = arith.addf %4, %6 : vector<16x128xf32>
    %cst_6 = arith.constant 0.000000e+00 : f32
    %8 = vector.broadcast %cst_6 : f32 to vector<16x128xf32>
    %9 = arith.maximumf %7, %8 : vector<16x128xf32>
    %c1 = arith.constant 1 : index
    %c0_7 = arith.constant 0 : index
    %c0_8 = arith.constant 0 : index
    %10 = vector.load %arg2[%c1, %c0_7, %c0_8] : memref<4x16x16xf32, #tpu.memory_space<vmem>>, vector<1x16x16xf32>
    %11 = vector.shape_cast %10 : vector<1x16x16xf32> to vector<16x16xf32>
    %cst_9 = arith.constant dense<0.000000e+00> : vector<16x128xf32>
    %12 = tpu.matmul %11, %9, %cst_9 {dimension_numbers = #tpu.dot_dimension_numbers<[1], [0], [0], [1], [0, 0, 1, 1], [], []>} : vector<16x16xf32>, vector<16x128xf32>, vector<16x128xf32> -> vector<16x128xf32>
    %13 = vector.extract_strided_slice %1 {offsets = [0, 1], sizes = [16, 1], strides = [1, 1]} : vector<16x4xf32> to vector<16x1xf32>
    %14 = vector.broadcast %13 : vector<16x1xf32> to vector<16x128xf32>
    %15 = arith.addf %12, %14 : vector<16x128xf32>
    %cst_10 = arith.constant 0.000000e+00 : f32
    %16 = vector.broadcast %cst_10 : f32 to vector<16x128xf32>
    %17 = arith.maximumf %15, %16 : vector<16x128xf32>
    %c2 = arith.constant 2 : index
    %c0_11 = arith.constant 0 : index
    %c0_12 = arith.constant 0 : index
    %18 = vector.load %arg2[%c2, %c0_11, %c0_12] : memref<4x16x16xf32, #tpu.memory_space<vmem>>, vector<1x16x16xf32>
    %19 = vector.shape_cast %18 : vector<1x16x16xf32> to vector<16x16xf32>
    %cst_13 = arith.constant dense<0.000000e+00> : vector<16x128xf32>
    %20 = tpu.matmul %19, %17, %cst_13 {dimension_numbers = #tpu.dot_dimension_numbers<[1], [0], [0], [1], [0, 0, 1, 1], [], []>} : vector<16x16xf32>, vector<16x128xf32>, vector<16x128xf32> -> vector<16x128xf32>
    %21 = vector.extract_strided_slice %1 {offsets = [0, 2], sizes = [16, 1], strides = [1, 1]} : vector<16x4xf32> to vector<16x1xf32>
    %22 = vector.broadcast %21 : vector<16x1xf32> to vector<16x128xf32>
    %23 = arith.addf %20, %22 : vector<16x128xf32>
    %cst_14 = arith.constant 0.000000e+00 : f32
    %24 = vector.broadcast %cst_14 : f32 to vector<16x128xf32>
    %25 = arith.maximumf %23, %24 : vector<16x128xf32>
    %c3 = arith.constant 3 : index
    %c0_15 = arith.constant 0 : index
    %c0_16 = arith.constant 0 : index
    %26 = vector.load %arg2[%c3, %c0_15, %c0_16] : memref<4x16x16xf32, #tpu.memory_space<vmem>>, vector<1x16x16xf32>
    %27 = vector.shape_cast %26 : vector<1x16x16xf32> to vector<16x16xf32>
    %cst_17 = arith.constant dense<0.000000e+00> : vector<16x128xf32>
    %28 = tpu.matmul %27, %25, %cst_17 {dimension_numbers = #tpu.dot_dimension_numbers<[1], [0], [0], [1], [0, 0, 1, 1], [], []>} : vector<16x16xf32>, vector<16x128xf32>, vector<16x128xf32> -> vector<16x128xf32>
    %29 = vector.extract_strided_slice %1 {offsets = [0, 3], sizes = [16, 1], strides = [1, 1]} : vector<16x4xf32> to vector<16x1xf32>
    %30 = vector.broadcast %29 : vector<16x1xf32> to vector<16x128xf32>
    %31 = arith.addf %28, %30 : vector<16x128xf32>
    %32 = vector.extract_strided_slice %31 {offsets = [0, 0], sizes = [2, 128], strides = [1, 1]} : vector<16x128xf32> to vector<2x128xf32>
    %cst_18 = arith.constant dense<0xFF800000> : vector<128xf32>
    %33 = vector.multi_reduction <maximumf>, %32, %cst_18 [0] : vector<2x128xf32> to vector<128xf32>
    %34 = vector.shape_cast %33 : vector<128xf32> to vector<1x128xf32>
    %35 = vector.broadcast %34 : vector<1x128xf32> to vector<2x128xf32>
    %36 = arith.subf %32, %35 : vector<2x128xf32>
    %37 = math.exp %36 : vector<2x128xf32>
    %cst_19 = arith.constant dense<0.000000e+00> : vector<128xf32>
    %38 = vector.multi_reduction <add>, %37, %cst_19 [0] : vector<2x128xf32> to vector<128xf32>
    %39 = vector.shape_cast %38 : vector<128xf32> to vector<1x128xf32>
    %40 = tpu.reciprocal %39 {approx = true} : vector<1x128xf32> -> vector<1x128xf32>
    %41 = vector.broadcast %40 : vector<1x128xf32> to vector<2x128xf32>
    %42 = arith.mulf %37, %41 : vector<2x128xf32>
    %c0_20 = arith.constant 0 : index
    %c0_21 = arith.constant 0 : index
    %43 = vector.load %arg4[%c0_20, %c0_21] : memref<2x128xf32, #tpu.memory_space<vmem>>, vector<2x128xf32>
    tpu.vector_store %arg4[%c0_20, %c0_21], %42 {strides = array<i32>} : memref<2x128xf32, #tpu.memory_space<vmem>>, vector<2x128xf32>,
    return
  }
  func.func @transform_0(%arg0: i32) -> (i32, i32) {
    %c0_i32 = arith.constant 0 : i32
    %c0_i32_0 = arith.constant 0 : i32
    return %c0_i32, %arg0 : i32, i32
  }
  func.func @transform_1(%arg0: i32) -> (i32, i32, i32) {
    %c0_i32 = arith.constant 0 : i32
    %c0_i32_0 = arith.constant 0 : i32
    %c0_i32_1 = arith.constant 0 : i32
    %c0_i32_2 = arith.constant 0 : i32
    return %c0_i32, %c0_i32_0, %c0_i32_1 : i32, i32, i32
  }
  func.func @transform_2(%arg0: i32) -> (i32, i32) {
    %c0_i32 = arith.constant 0 : i32
    %c0_i32_0 = arith.constant 0 : i32
    %c0_i32_1 = arith.constant 0 : i32
    return %c0_i32, %c0_i32_0 : i32, i32
  }
  func.func @transform_3(%arg0: i32) -> (i32, i32) {
    %c0_i32 = arith.constant 0 : i32
    %c0_i32_0 = arith.constant 0 : i32
    return %c0_i32, %arg0 : i32, i32
  }
}

</mosaic_0001>

<llo_original>
// kernel: tpu_custom_call.1
$region0: #{tpu_custom_call.1}
  #allocation0 [shape = 'u32[]', space=smem, size = 0x4, offset = 0x4, fixed_abs, tag = 'smem constant byte address 0x4 - core index']
  #allocation1 [shape = 'u32[144,128]{1,0:T(1,128)}', space=vmem, size = 0x12000, scoped, tag = 'internal scratch']
  %s0 = inlined_call_operand.vmem [shape: f32[16,128], index: 0, kind: input, shape index: {}]
  %s1 = inlined_call_operand.hbm [shape: f32[4,16,16], index: 1, kind: input, shape index: {}]
  %s2 = inlined_call_operand.vmem [shape: f32[16,4], index: 2, kind: input, shape index: {}]
  %s3 = inlined_call_operand.hbm [shape: f32[2,128], index: 3, kind: output, shape index: {}]
  %s4 = sld [smem:[#allocation0]]
  $region26: #{tpu_custom_call.1} parent=0
    _
  %s6 = ssub.s32 1, %s4
  %s7 = scalar_select 0, %s6, %s4
  $region1: #{tpu_custom_call.1} parent=0
    #allocation2 [shape = 'u8[32768]{0}', space=vmem, size = 0x8000, scoped, tag = 'input window, operand 1, single buffered']
    #allocation3 [shape = 's32[1]{0}', space=sflag, size = 0x4, scoped, tag = 'scoped memory for tpu_custom_call.1']
    #allocation4 [shape = 's32[1]{0}', space=sflag, size = 0x4, scoped, tag = 'scoped memory for tpu_custom_call.1']
    #allocation5 [shape = 'u8[1024]{0}', space=vmem, size = 0x400, scoped, tag = 'output window, operand 0, single buffered']
    %8 = vsyncpa [#allocation3], 0
    %9 = vsyncpa [#allocation4], 0
    // Predicated region
    $region2: #{tpu_custom_call.1} parent=1 // pred_check
      _
    $region3: #{tpu_custom_call.1} parent=1 // pred_check_branch
      %11 = sbr.rel (0) target = $region5
    $region4: #{tpu_custom_call.1} parent=1 // pred_region
      _
    $region5: #{tpu_custom_call.1} parent=1 // pred_fallthru
      _
    // Predicated region
    $region6: #{tpu_custom_call.1} parent=1 // pred_check
      _
    $region7: #{tpu_custom_call.1} parent=1 // pred_check_branch
      %13 = sbr.rel (0) target = $region9
    $region8: #{tpu_custom_call.1} parent=1 // pred_region
      %s15 = ssub.s32 1024, 1024
      %16 = vsyncadd [#allocation3], %s15
      %s17 = sshll.u32 [#allocation2], 4
      %s18 = int_to_ptr.vmem [resolvable:$true] %s17
      %23 = dma.hbm_to_vmem [thread:$0]  %s1, 1024, %s18, [#allocation3], 128, 128, 8
    $region9: #{tpu_custom_call.1} parent=1 // pred_fallthru
      _
    // Predicated region
    $region10: #{tpu_custom_call.1} parent=1 // pred_check
      _
    $region11: #{tpu_custom_call.1} parent=1 // pred_check_branch
      %25 = sbr.rel (0) target = $region13
    $region12: #{tpu_custom_call.1} parent=1 // pred_region
      _
    $region13: #{tpu_custom_call.1} parent=1 // pred_fallthru
      _
    // Predicated region
    $region14: #{tpu_custom_call.1} parent=1 // pred_check
      _
    $region15: #{tpu_custom_call.1} parent=1 // pred_check_branch
      %27 = sbr.rel (0) target = $region17
    $region16: #{tpu_custom_call.1} parent=1 // pred_region
      %28 = dma.done [#allocation3], 1024
    $region17: #{tpu_custom_call.1} parent=1 // pred_fallthru
      _
    %v29 = vld [vmem:[%s0] sm:$0xff]
    %v30 = vld [vmem:[%s0 + $0x8] sm:$0xff]
    %v31 = vld [vmem:[%s2] sm:$0xff]
    %v32 = vld [vmem:[%s2 + $0x8] sm:$0xff]
    %v33 = vld [vmem:[#allocation2] sm:$0xff]
    %v34 = vld [vmem:[#allocation2 + $0x8] sm:$0xff]
    %36 = vset.pattern.permute.xlu0 0
    %37 = vperm.xlu0 %36, %v31
    %v38 = vpop.permute.xlu0 %37
    %41 = vset.pattern.permute.xlu0 0
    %42 = vperm.xlu0 %41, %v32
    %v43 = vpop.permute.xlu0 %42
    %vm45 = vcmask 130048
    %v47 = vsel %vm45, %v33, 0
    %v50 = vsel %vm45, %v34, 0
    %52 = vmatprep.subr.mxu0 0.0
    %53 = vmatpush1.msra.mxu0 %v29
    %54 = vmatprep.subr.mxu0 0.0
    %55 = vmatpush1.msra.mxu0 %v30
    %56 = vmatprep.subr.mxu0 0.0
    %57 = vmatpush1.msra.mxu0 0.0
    %58 = vmatprep.subr.mxu0 0.0
    %59 = vmatpush1.msra.mxu0 0.0
    %60 = vmatprep.subr.mxu0 0.0
    %61 = vmatpush1.msra.mxu0 0.0
    %62 = vmatprep.subr.mxu0 0.0
    %63 = vmatpush1.msra.mxu0 0.0
    %64 = vmatprep.subr.mxu0 0.0
    %65 = vmatpush1.msra.mxu0 0.0
    %66 = vmatprep.subr.mxu0 0.0
    %67 = vmatpush1.msra.mxu0 0.0
    %68 = vmatprep.subr.mxu0 0.0
    %69 = vmatpush1.msra.mxu0 0.0
    %70 = vmatprep.subr.mxu0 0.0
    %71 = vmatpush1.msra.mxu0 0.0
    %72 = vmatprep.subr.mxu0 0.0
    %73 = vmatpush1.msra.mxu0 0.0
    %74 = vmatprep.subr.mxu0 0.0
    %75 = vmatpush1.msra.mxu0 0.0
    %76 = vmatprep.subr.mxu0 0.0
    %77 = vmatpush1.msra.mxu0 0.0
    %78 = vmatprep.subr.mxu0 0.0
    %79 = vmatpush1.msra.mxu0 0.0
    %80 = vmatprep.subr.mxu0 0.0
    %81 = vmatpush1.msra.mxu0 0.0
    %82 = vmatprep.subr.mxu0 0.0
    %83 = vmatpush1.msra.mxu0 0.0
    %84 = vmatprep.subr.mxu0 0.0
    %85 = vmatpush1.msra.mxu0 0.0
    %86 = vmatprep.subr.mxu0 0.0
    %87 = vmatpush1.msra.mxu0 0.0
    %88 = vmatprep.subr.mxu0 0.0
    %89 = vmatpush1.msra.mxu0 0.0
    %90 = vmatprep.subr.mxu0 0.0
    %91 = vmatpush1.msra.mxu0 0.0
    %92 = vmatprep.subr.mxu0 0.0
    %93 = vmatpush1.msra.mxu0 0.0
    %94 = vmatprep.subr.mxu0 0.0
    %95 = vmatpush1.msra.mxu0 0.0
    %96 = vmatprep.subr.mxu0 0.0
    %97 = vmatpush1.msra.mxu0 0.0
    %98 = vmatprep.subr.mxu0 0.0
    %99 = vmatpush1.msra.mxu0 0.0
    %100 = vmatprep.subr.mxu0 0.0
    %101 = vmatpush1.msra.mxu0 0.0
    %102 = vmatprep.subr.mxu0 0.0
    %103 = vmatpush1.msra.mxu0 0.0
    %104 = vmatprep.subr.mxu0 0.0
    %105 = vmatpush1.msra.mxu0 0.0
    %106 = vmatprep.subr.mxu0 0.0
    %107 = vmatpush1.msra.mxu0 0.0
    %108 = vmatprep.subr.mxu0 0.0
    %109 = vmatpush1.msra.mxu0 0.0
    %110 = vmatprep.subr.mxu0 0.0
    %111 = vmatpush1.msra.mxu0 0.0
    %112 = vmatprep.subr.mxu0 0.0
    %113 = vmatpush1.msra.mxu0 0.0
    %114 = vmatprep.subr.mxu0 0.0
    %115 = vmatpush1.msra.mxu0 0.0
    %116 = vmatprep.mubr.f32.mxu0 0.0
    %117 = vmatmul.mubr.f32.gmra.mrb[0].mxu0 %v47
    %v118 = vpop.f32.mrb[0].mxu0
    %v119 = vadd.f32 %v38, %v118
    %v120 = vpop.f32.mrb[0].mxu0
    %121 = vmatprep.mubr.f32.mxu0 0.0
    %122 = vmatmul.mubr.f32.gmra.mrb[0].mxu0 %v50
    %v123 = vpop.f32.mrb[0].mxu0
    %v124 = vadd.f32 %v43, %v123
    %v125 = vpop.f32.mrb[0].mxu0
    %126 = vdwg.mxu0
    %v127 = vmax.f32 %v119, 0.0
    %v128 = vmax.f32 %v124, 0.0
    %s129 = scalar_lea.vmem [#allocation2], 16
    %v130 = vld [vmem:[%s129] sm:$0xff]
    %v131 = vld [vmem:[%s129 + $0x8] sm:$0xff]
    %132 = vset.pattern.permute.xlu0 1
    %133 = vperm.xlu0 %132, %v31
    %v134 = vpop.permute.xlu0 %133
    %136 = vset.pattern.permute.xlu0 1
    %137 = vperm.xlu0 %136, %v32
    %v138 = vpop.permute.xlu0 %137
    %v141 = vsel %vm45, %v130, 0
    %v144 = vsel %vm45, %v131, 0
    %146 = vmatprep.subr.mxu0 0.0
    %147 = vmatpush1.msra.mxu0 %v127
    %148 = vmatprep.subr.mxu0 0.0
    %149 = vmatpush1.msra.mxu0 %v128
    %150 = vmatprep.subr.mxu0 0.0
    %151 = vmatpush1.msra.mxu0 0.0
    %152 = vmatprep.subr.mxu0 0.0
    %153 = vmatpush1.msra.mxu0 0.0
    %154 = vmatprep.subr.mxu0 0.0
    %155 = vmatpush1.msra.mxu0 0.0
    %156 = vmatprep.subr.mxu0 0.0
    %157 = vmatpush1.msra.mxu0 0.0
    %158 = vmatprep.subr.mxu0 0.0
    %159 = vmatpush1.msra.mxu0 0.0
    %160 = vmatprep.subr.mxu0 0.0
    %161 = vmatpush1.msra.mxu0 0.0
    %162 = vmatprep.subr.mxu0 0.0
    %163 = vmatpush1.msra.mxu0 0.0
    %164 = vmatprep.subr.mxu0 0.0
    %165 = vmatpush1.msra.mxu0 0.0
    %166 = vmatprep.subr.mxu0 0.0
    %167 = vmatpush1.msra.mxu0 0.0
    %168 = vmatprep.subr.mxu0 0.0
    %169 = vmatpush1.msra.mxu0 0.0
    %170 = vmatprep.subr.mxu0 0.0
    %171 = vmatpush1.msra.mxu0 0.0
    %172 = vmatprep.subr.mxu0 0.0
    %173 = vmatpush1.msra.mxu0 0.0
    %174 = vmatprep.subr.mxu0 0.0
    %175 = vmatpush1.msra.mxu0 0.0
    %176 = vmatprep.subr.mxu0 0.0
    %177 = vmatpush1.msra.mxu0 0.0
    %178 = vmatprep.subr.mxu0 0.0
    %179 = vmatpush1.msra.mxu0 0.0
    %180 = vmatprep.subr.mxu0 0.0
    %181 = vmatpush1.msra.mxu0 0.0
    %182 = vmatprep.subr.mxu0 0.0
    %183 = vmatpush1.msra.mxu0 0.0
    %184 = vmatprep.subr.mxu0 0.0
    %185 = vmatpush1.msra.mxu0 0.0
    %186 = vmatprep.subr.mxu0 0.0
    %187 = vmatpush1.msra.mxu0 0.0
    %188 = vmatprep.subr.mxu0 0.0
    %189 = vmatpush1.msra.mxu0 0.0
    %190 = vmatprep.subr.mxu0 0.0
    %191 = vmatpush1.msra.mxu0 0.0
    %192 = vmatprep.subr.mxu0 0.0
    %193 = vmatpush1.msra.mxu0 0.0
    %194 = vmatprep.subr.mxu0 0.0
    %195 = vmatpush1.msra.mxu0 0.0
    %196 = vmatprep.subr.mxu0 0.0
    %197 = vmatpush1.msra.mxu0 0.0
    %198 = vmatprep.subr.mxu0 0.0
    %199 = vmatpush1.msra.mxu0 0.0
    %200 = vmatprep.subr.mxu0 0.0
    %201 = vmatpush1.msra.mxu0 0.0
    %202 = vmatprep.subr.mxu0 0.0
    %203 = vmatpush1.msra.mxu0 0.0
    %204 = vmatprep.subr.mxu0 0.0
    %205 = vmatpush1.msra.mxu0 0.0
    %206 = vmatprep.subr.mxu0 0.0
    %207 = vmatpush1.msra.mxu0 0.0
    %208 = vmatprep.subr.mxu0 0.0
    %209 = vmatpush1.msra.mxu0 0.0
    %210 = vmatprep.mubr.f32.mxu0 0.0
    %211 = vmatmul.mubr.f32.gmra.mrb[0].mxu0 %v141
    %v212 = vpop.f32.mrb[0].mxu0
    %v213 = vadd.f32 %v134, %v212
    %v214 = vpop.f32.mrb[0].mxu0
    %215 = vmatprep.mubr.f32.mxu0 0.0
    %216 = vmatmul.mubr.f32.gmra.mrb[0].mxu0 %v144
    %v217 = vpop.f32.mrb[0].mxu0
    %v218 = vadd.f32 %v138, %v217
    %v219 = vpop.f32.mrb[0].mxu0
    %220 = vdwg.mxu0
    %v221 = vmax.f32 %v213, 0.0
    %v222 = vmax.f32 %v218, 0.0
    %s223 = scalar_lea.vmem [#allocation2], 32
    %v224 = vld [vmem:[%s223] sm:$0xff]
    %v225 = vld [vmem:[%s223 + $0x8] sm:$0xff]
    %226 = vset.pattern.permute.xlu0 2
    %227 = vperm.xlu0 %226, %v31
    %v228 = vpop.permute.xlu0 %227
    %230 = vset.pattern.permute.xlu0 2
    %231 = vperm.xlu0 %230, %v32
    %v232 = vpop.permute.xlu0 %231
    %v235 = vsel %vm45, %v224, 0
    %v238 = vsel %vm45, %v225, 0
    %240 = vmatprep.subr.mxu0 0.0
    %241 = vmatpush1.msra.mxu0 %v221
    %242 = vmatprep.subr.mxu0 0.0
    %243 = vmatpush1.msra.mxu0 %v222
    %244 = vmatprep.subr.mxu0 0.0
    %245 = vmatpush1.msra.mxu0 0.0
    %246 = vmatprep.subr.mxu0 0.0
    %247 = vmatpush1.msra.mxu0 0.0
    %248 = vmatprep.subr.mxu0 0.0
    %249 = vmatpush1.msra.mxu0 0.0
    %250 = vmatprep.subr.mxu0 0.0
    %251 = vmatpush1.msra.mxu0 0.0
    %252 = vmatprep.subr.mxu0 0.0
    %253 = vmatpush1.msra.mxu0 0.0
    %254 = vmatprep.subr.mxu0 0.0
    %255 = vmatpush1.msra.mxu0 0.0
    %256 = vmatprep.subr.mxu0 0.0
    %257 = vmatpush1.msra.mxu0 0.0
    %258 = vmatprep.subr.mxu0 0.0
    %259 = vmatpush1.msra.mxu0 0.0
    %260 = vmatprep.subr.mxu0 0.0
    %261 = vmatpush1.msra.mxu0 0.0
    %262 = vmatprep.subr.mxu0 0.0
    %263 = vmatpush1.msra.mxu0 0.0
    %264 = vmatprep.subr.mxu0 0.0
    %265 = vmatpush1.msra.mxu0 0.0
    %266 = vmatprep.subr.mxu0 0.0
    %267 = vmatpush1.msra.mxu0 0.0
    %268 = vmatprep.subr.mxu0 0.0
    %269 = vmatpush1.msra.mxu0 0.0
    %270 = vmatprep.subr.mxu0 0.0
    %271 = vmatpush1.msra.mxu0 0.0
    %272 = vmatprep.subr.mxu0 0.0
    %273 = vmatpush1.msra.mxu0 0.0
    %274 = vmatprep.subr.mxu0 0.0
    %275 = vmatpush1.msra.mxu0 0.0
    %276 = vmatprep.subr.mxu0 0.0
    %277 = vmatpush1.msra.mxu0 0.0
    %278 = vmatprep.subr.mxu0 0.0
    %279 = vmatpush1.msra.mxu0 0.0
    %280 = vmatprep.subr.mxu0 0.0
    %281 = vmatpush1.msra.mxu0 0.0
    %282 = vmatprep.subr.mxu0 0.0
    %283 = vmatpush1.msra.mxu0 0.0
    %284 = vmatprep.subr.mxu0 0.0
    %285 = vmatpush1.msra.mxu0 0.0
    %286 = vmatprep.subr.mxu0 0.0
    %287 = vmatpush1.msra.mxu0 0.0
    %288 = vmatprep.subr.mxu0 0.0
    %289 = vmatpush1.msra.mxu0 0.0
    %290 = vmatprep.subr.mxu0 0.0
    %291 = vmatpush1.msra.mxu0 0.0
    %292 = vmatprep.subr.mxu0 0.0
    %293 = vmatpush1.msra.mxu0 0.0
    %294 = vmatprep.subr.mxu0 0.0
    %295 = vmatpush1.msra.mxu0 0.0
    %296 = vmatprep.subr.mxu0 0.0
    %297 = vmatpush1.msra.mxu0 0.0
    %298 = vmatprep.subr.mxu0 0.0
    %299 = vmatpush1.msra.mxu0 0.0
    %300 = vmatprep.subr.mxu0 0.0
    %301 = vmatpush1.msra.mxu0 0.0
    %302 = vmatprep.subr.mxu0 0.0
    %303 = vmatpush1.msra.mxu0 0.0
    %304 = vmatprep.mubr.f32.mxu0 0.0
    %305 = vmatmul.mubr.f32.gmra.mrb[0].mxu0 %v235
    %v306 = vpop.f32.mrb[0].mxu0
    %v307 = vadd.f32 %v228, %v306
    %v308 = vpop.f32.mrb[0].mxu0
    %309 = vmatprep.mubr.f32.mxu0 0.0
    %310 = vmatmul.mubr.f32.gmra.mrb[0].mxu0 %v238
    %v311 = vpop.f32.mrb[0].mxu0
    %v312 = vadd.f32 %v232, %v311
    %v313 = vpop.f32.mrb[0].mxu0
    %314 = vdwg.mxu0
    %v315 = vmax.f32 %v307, 0.0
    %v316 = vmax.f32 %v312, 0.0
    %s317 = scalar_lea.vmem [#allocation2], 48
    %v318 = vld [vmem:[%s317] sm:$0xff]
    %v319 = vld [vmem:[%s317 + $0x8] sm:$0xff]
    %320 = vset.pattern.permute.xlu0 3
    %321 = vperm.xlu0 %320, %v31
    %v322 = vpop.permute.xlu0 %321
    %324 = vset.pattern.permute.xlu0 3
    %325 = vperm.xlu0 %324, %v32
    %v326 = vpop.permute.xlu0 %325
    %v328 = vsel %vm45, %v318, 0
    %v331 = vsel %vm45, %v319, 0
    %333 = vmatprep.subr.mxu0 0.0
    %334 = vmatpush1.msra.mxu0 %v315
    %335 = vmatprep.subr.mxu0 0.0
    %336 = vmatpush1.msra.mxu0 %v316
    %337 = vmatprep.subr.mxu0 0.0
    %338 = vmatpush1.msra.mxu0 0.0
    %339 = vmatprep.subr.mxu0 0.0
    %340 = vmatpush1.msra.mxu0 0.0
    %341 = vmatprep.subr.mxu0 0.0
    %342 = vmatpush1.msra.mxu0 0.0
    %343 = vmatprep.subr.mxu0 0.0
    %344 = vmatpush1.msra.mxu0 0.0
    %345 = vmatprep.subr.mxu0 0.0
    %346 = vmatpush1.msra.mxu0 0.0
    %347 = vmatprep.subr.mxu0 0.0
    %348 = vmatpush1.msra.mxu0 0.0
    %349 = vmatprep.subr.mxu0 0.0
    %350 = vmatpush1.msra.mxu0 0.0
    %351 = vmatprep.subr.mxu0 0.0
    %352 = vmatpush1.msra.mxu0 0.0
    %353 = vmatprep.subr.mxu0 0.0
    %354 = vmatpush1.msra.mxu0 0.0
    %355 = vmatprep.subr.mxu0 0.0
    %356 = vmatpush1.msra.mxu0 0.0
    %357 = vmatprep.subr.mxu0 0.0
    %358 = vmatpush1.msra.mxu0 0.0
    %359 = vmatprep.subr.mxu0 0.0
    %360 = vmatpush1.msra.mxu0 0.0
    %361 = vmatprep.subr.mxu0 0.0
    %362 = vmatpush1.msra.mxu0 0.0
    %363 = vmatprep.subr.mxu0 0.0
    %364 = vmatpush1.msra.mxu0 0.0
    %365 = vmatprep.subr.mxu0 0.0
    %366 = vmatpush1.msra.mxu0 0.0
    %367 = vmatprep.subr.mxu0 0.0
    %368 = vmatpush1.msra.mxu0 0.0
    %369 = vmatprep.subr.mxu0 0.0
    %370 = vmatpush1.msra.mxu0 0.0
    %371 = vmatprep.subr.mxu0 0.0
    %372 = vmatpush1.msra.mxu0 0.0
    %373 = vmatprep.subr.mxu0 0.0
    %374 = vmatpush1.msra.mxu0 0.0
    %375 = vmatprep.subr.mxu0 0.0
    %376 = vmatpush1.msra.mxu0 0.0
    %377 = vmatprep.subr.mxu0 0.0
    %378 = vmatpush1.msra.mxu0 0.0
    %379 = vmatprep.subr.mxu0 0.0
    %380 = vmatpush1.msra.mxu0 0.0
    %381 = vmatprep.subr.mxu0 0.0
    %382 = vmatpush1.msra.mxu0 0.0
    %383 = vmatprep.subr.mxu0 0.0
    %384 = vmatpush1.msra.mxu0 0.0
    %385 = vmatprep.subr.mxu0 0.0
    %386 = vmatpush1.msra.mxu0 0.0
    %387 = vmatprep.subr.mxu0 0.0
    %388 = vmatpush1.msra.mxu0 0.0
    %389 = vmatprep.subr.mxu0 0.0
    %390 = vmatpush1.msra.mxu0 0.0
    %391 = vmatprep.subr.mxu0 0.0
    %392 = vmatpush1.msra.mxu0 0.0
    %393 = vmatprep.subr.mxu0 0.0
    %394 = vmatpush1.msra.mxu0 0.0
    %395 = vmatprep.subr.mxu0 0.0
    %396 = vmatpush1.msra.mxu0 0.0
    %397 = vmatprep.mubr.f32.mxu0 0.0
    %398 = vmatmul.mubr.f32.gmra.mrb[0].mxu0 %v328
    %v399 = vpop.f32.mrb[0].mxu0
    %v400 = vadd.f32 %v322, %v399
    %v401 = vpop.f32.mrb[0].mxu0
    %402 = vmatprep.mubr.f32.mxu0 0.0
    %403 = vmatmul.mubr.f32.gmra.mrb[0].mxu0 %v331
    %v404 = vpop.f32.mrb[0].mxu0
    %v405 = vpop.f32.mrb[0].mxu0
    %406 = vdwg.mxu0
    %vm407 = vcmask 1041408
    %v408 = vsel %vm407, %v400, -inf
    %v409 = vrot.slane %v408, 4
    %v410 = vmax.f32 %v408, %v409
    %v411 = vrot.slane %v410, 2
    %v412 = vmax.f32 %v410, %v411
    %v413 = vrot.slane %v412, 1
    %v414 = vmax.f32 %v412, %v413
    %v415 = vsub.f32 %v400, %v414
    %v416 = vmul.f32 %v415, 1.442695
    %v417 = vpow.pop %v416
    %v418 = vsel %vm407, %v417, 0.0
    %v419 = vrot.slane %v418, 4
    %v420 = vadd.f32 %v418, %v419
    %v421 = vrot.slane %v420, 2
    %v422 = vadd.f32 %v420, %v421
    %v423 = vrot.slane %v422, 1
    %v424 = vadd.f32 %v422, %v423
    %v425 = vrcp.pop %v424
    %v426 = vmul.f32 %v417, %v425
    %427 = vst [vmem:[#allocation5] sm:$0x3] %v426
    // Predicated region
    $region18: #{tpu_custom_call.1} parent=1 // pred_check
      _
    $region19: #{tpu_custom_call.1} parent=1 // pred_check_branch
      %429 = sbr.rel (0) target = $region21
    $region20: #{tpu_custom_call.1} parent=1 // pred_region
      %s431 = ssub.s32 32, 32
      %432 = vsyncadd [#allocation4], %s431
      %s434 = sshll.u32 [#allocation5], 4
      %s435 = int_to_ptr.vmem [resolvable:$true] %s434
      %437 = dma.vmem_to_hbm [thread:$0]  %s435, 32, %s3, [#allocation4]
    $region21: #{tpu_custom_call.1} parent=1 // pred_fallthru
      _
    // Predicated region
    $region22: #{tpu_custom_call.1} parent=1 // pred_check
      _
    $region23: #{tpu_custom_call.1} parent=1 // pred_check_branch
      %439 = sbr.rel (0) target = $region25
    $region24: #{tpu_custom_call.1} parent=1 // pred_region
      %440 = dma.done [#allocation4], 32
    $region25: #{tpu_custom_call.1} parent=1 // pred_fallthru
      _
    %441 = vsyncpa [#allocation3], 1
    %442 = vsyncpa [#allocation4], 1

</llo_original>
